<compile_context>
chip_gen: v5e
topology: v5e:2x2
jax: 0.10.0
libtpu: 0.0.40
codegen_flags: <defaults>
</compile_context>

<pallas_src>
import math

import jax
import jax.numpy as jnp
from jax.experimental import pallas as pl
from jax.experimental.pallas import tpu as pltpu

# ---- model dimensions (from the module's __init__ under the config above) ----
ACTION_DIM = 5
N_AGENTS = 4
N_OBSTACLES = 4
STATE_DIM = N_AGENTS * 3 + N_OBSTACLES            # 16
IN_DIM = STATE_DIM + N_AGENTS * ACTION_DIM        # 36
H1, H2, H3, OUT = 1024, 128, 32, 1

TB_MAX = 512   # max batch-tile rows per grid step


def _round_up(n, m):
    return (n + m - 1) // m * m


def _choose_tiling(B):
    """Pick (TB, n_tiles) minimizing padding; >=2 tiles once B > 128 so the
    'parallel' grid axis spans both v7x TensorCores."""
    if B <= 128:
        return _round_up(max(B, 1), 8), 1
    n_tiles = max(2, pl.cdiv(B, TB_MAX))
    tb = _round_up(pl.cdiv(B, n_tiles), 128)
    return tb, n_tiles


def _dqn_critic_kernel(x_ref, w1_ref, b1_ref, w2_ref, b2_ref,
                       w3_ref, b3_ref, w4_ref, b4_ref, o_ref):
    """One batch tile of the MLP: (TB,36)->1024->128->32->1 with ReLUs."""
    # layer 1 — single fused dot (concat already done in the wrapper), f32 acc
    h = jnp.dot(x_ref[...], w1_ref[...],
                preferred_element_type=jnp.float32) + b1_ref[...]
    h = jnp.maximum(h, 0.0)
    # layer 2
    h = jnp.dot(h.astype(jnp.bfloat16), w2_ref[...],
                preferred_element_type=jnp.float32) + b2_ref[...]
    h = jnp.maximum(h, 0.0)
    # layer 3
    h = jnp.dot(h.astype(jnp.bfloat16), w3_ref[...],
                preferred_element_type=jnp.float32) + b3_ref[...]
    h = jnp.maximum(h, 0.0)
    # layer 4 (32 -> 1): VPU multiply + row-reduce in f32 (off the MXU slot)
    o_ref[...] = (jnp.sum(h * w4_ref[...], axis=-1, keepdims=True)
                  + b4_ref[...]).astype(o_ref.dtype)


def dqn_critic_forward(x, actions, params):
    """x: (B, STATE_DIM); actions: list of (B, ACTION_DIM), len N_AGENTS."""
    (w1, b1), (w2, b2), (w3, b3), (w4, b4) = params
    B = x.shape[0]
    TB, n_tiles = _choose_tiling(B)
    B_pad = TB * n_tiles
    pad = B_pad - B

    # Wrapper-side concat (layout plumbing, trivial B x 36 bf16 tensor).
    x_cat = jnp.concatenate([x, *actions], axis=1).astype(jnp.bfloat16)
    x_cat = jnp.pad(x_cat, ((0, pad), (0, 0)))

    w1b = w1.astype(jnp.bfloat16)            # (36, 1024) — one resident block
    w2b = w2.astype(jnp.bfloat16)
    w3b = w3.astype(jnp.bfloat16)
    w4r = w4.astype(jnp.float32).T            # (1, 32) row for the VPU final layer
    b1f, b2f, b3f, b4f = (b.astype(jnp.float32) for b in (b1, b2, b3, b4))

    grid = (n_tiles,)

    def batched(shape):
        return pl.BlockSpec(shape, lambda i: (i, 0))

    def resident(shape):                      # constant block index -> loaded once
        return pl.BlockSpec(shape, lambda i: (0, 0))

    in_specs = [
        batched((TB, IN_DIM)),                # one input stream per step
        resident((IN_DIM, H1)), resident((1, H1)),
        resident((H1, H2)), resident((1, H2)),
        resident((H2, H3)), resident((1, H3)),
        resident((1, H3)), resident((1, OUT)),
    ]
    out_specs = batched((TB, OUT))

    flops = 2 * B_pad * (IN_DIM * H1 + H1 * H2 + H2 * H3 + H3 * OUT)
    bytes_accessed = (
        2 * (IN_DIM * H1 + H1 * H2 + H2 * H3)          # bf16 weights
        + 4 * (H1 + H2 + H3 + H3 + OUT)                # f32 biases + w4 row
        + 2 * B_pad * IN_DIM + 4 * B_pad * OUT)        # activations in / out

    out = pl.pallas_call(
        _dqn_critic_kernel,
        out_shape=jax.ShapeDtypeStruct((B_pad, OUT), jnp.float32),
        grid=grid,
        in_specs=in_specs,
        out_specs=out_specs,
        compiler_params=pltpu.CompilerParams(dimension_semantics=("parallel",)),
        cost_estimate=pl.CostEstimate(flops=flops, transcendentals=0,
                                      bytes_accessed=bytes_accessed),
    )(x_cat, w1b, b1f, w2b, b2f, w3b, b3f, w4r, b4f)
    return out[:B]


def init_params(key):
    """Deterministic init mimicking PyTorch nn.Linear default (U[-1/sqrt(fan_in), +])."""
    dims = [(IN_DIM, H1), (H1, H2), (H2, H3), (H3, OUT)]
    params = []
    for (din, dout) in dims:
        key, kw, kb = jax.random.split(key, 3)
        bound = 1.0 / math.sqrt(din)
        w = jax.random.uniform(kw, (din, dout), jnp.float32, -bound, bound)
        b = jax.random.uniform(kb, (1, dout), jnp.float32, -bound, bound)
        params.append((w, b))
    return params


def reference_forward(x, actions, params):
    h = jnp.concatenate([x, *actions], axis=1).astype(jnp.float32)
    (w1, b1), (w2, b2), (w3, b3), (w4, b4) = params
    h = jnp.maximum(h @ w1 + b1, 0.0)
    h = jnp.maximum(h @ w2 + b2, 0.0)
    h = jnp.maximum(h @ w3 + b3, 0.0)
    return h @ w4 + b4


if __name__ == "__main__":
    key = jax.random.PRNGKey(0)
    kp, kx, *ka = jax.random.split(key, 2 + N_AGENTS)

    B = 8
    params = init_params(kp)
    x = jax.random.normal(kx, (B, STATE_DIM), jnp.float32)
    actions = [jax.random.normal(k, (B, ACTION_DIM), jnp.float32) for k in ka]

    out = jax.block_until_ready(dqn_critic_forward(x, actions, params))
    ref = reference_forward(x, actions, params)

    assert out.shape == (B, 1), out.shape
    # bf16 weights/activations with f32 accumulation vs f32 reference -> ~1% agreement
    assert jnp.allclose(out, ref, atol=2e-2, rtol=2e-2), "mismatch vs JAX reference"
    print("KERNEL_OK")
</pallas_src>

<mosaic_0001>
module attributes {stable_mosaic.version = 11 : i64} {
  func.func @_dqn_critic_kernel(%arg0: i32, %arg1: memref<8x36xbf16, #tpu.memory_space<vmem>>, %arg2: memref<36x1024xbf16, #tpu.memory_space<vmem>>, %arg3: memref<1x1024xf32, #tpu.memory_space<vmem>>, %arg4: memref<1024x128xbf16, #tpu.memory_space<vmem>>, %arg5: memref<1x128xf32, #tpu.memory_space<vmem>>, %arg6: memref<128x32xbf16, #tpu.memory_space<vmem>>, %arg7: memref<1x32xf32, #tpu.memory_space<vmem>>, %arg8: memref<1x32xf32, #tpu.memory_space<vmem>>, %arg9: memref<1x1xf32, #tpu.memory_space<vmem>>, %arg10: memref<8x1xf32, #tpu.memory_space<vmem>>) attributes {dimension_semantics = [#tpu.dimension_semantics<parallel>], iteration_bounds = array<i64: 1>, scalar_prefetch = 0 : i64, scratch_operands = 0 : i64, tpu.core_type = #tpu.core_type<tc>, window_params = [{transform_indices = @transform_0, window_bounds = array<i64: 8, 36>}, {pipeline_mode = #tpu.pipeline_mode<synchronous>, transform_indices = @transform_1, window_bounds = array<i64: 36, 1024>}, {pipeline_mode = #tpu.pipeline_mode<synchronous>, transform_indices = @transform_2, window_bounds = array<i64: 1, 1024>}, {pipeline_mode = #tpu.pipeline_mode<synchronous>, transform_indices = @transform_3, window_bounds = array<i64: 1024, 128>}, {pipeline_mode = #tpu.pipeline_mode<synchronous>, transform_indices = @transform_4, window_bounds = array<i64: 1, 128>}, {pipeline_mode = #tpu.pipeline_mode<synchronous>, transform_indices = @transform_5, window_bounds = array<i64: 128, 32>}, {pipeline_mode = #tpu.pipeline_mode<synchronous>, transform_indices = @transform_6, window_bounds = array<i64: 1, 32>}, {pipeline_mode = #tpu.pipeline_mode<synchronous>, transform_indices = @transform_7, window_bounds = array<i64: 1, 32>}, {pipeline_mode = #tpu.pipeline_mode<synchronous>, transform_indices = @transform_8, window_bounds = array<i64: 1, 1>}, {transform_indices = @transform_9, window_bounds = array<i64: 8, 1>}]} {
    %c0 = arith.constant 0 : index
    %c0_0 = arith.constant 0 : index
    %0 = vector.load %arg1[%c0, %c0_0] : memref<8x36xbf16, #tpu.memory_space<vmem>>, vector<8x36xbf16>
    %c0_1 = arith.constant 0 : index
    %c0_2 = arith.constant 0 : index
    %1 = vector.load %arg2[%c0_1, %c0_2] : memref<36x1024xbf16, #tpu.memory_space<vmem>>, vector<36x1024xbf16>
    %cst = arith.constant dense<0.000000e+00> : vector<8x1024xf32>
    %2 = tpu.matmul %0, %1, %cst {dimension_numbers = #tpu.dot_dimension_numbers<[1], [0], [0], [1], [0, 0, 1, 1], [], []>} : vector<8x36xbf16>, vector<36x1024xbf16>, vector<8x1024xf32> -> vector<8x1024xf32>
    %c0_3 = arith.constant 0 : index
    %c0_4 = arith.constant 0 : index
    %3 = vector.load %arg3[%c0_3, %c0_4] : memref<1x1024xf32, #tpu.memory_space<vmem>>, vector<1x1024xf32>
    %4 = vector.broadcast %3 : vector<1x1024xf32> to vector<8x1024xf32>
    %5 = arith.addf %2, %4 : vector<8x1024xf32>
    %cst_5 = arith.constant 0.000000e+00 : f32
    %6 = vector.broadcast %cst_5 : f32 to vector<8x1024xf32>
    %7 = arith.maximumf %5, %6 : vector<8x1024xf32>
    %8 = arith.truncf %7 : vector<8x1024xf32> to vector<8x1024xbf16>
    %c0_6 = arith.constant 0 : index
    %c0_7 = arith.constant 0 : index
    %9 = vector.load %arg4[%c0_6, %c0_7] : memref<1024x128xbf16, #tpu.memory_space<vmem>>, vector<1024x128xbf16>
    %cst_8 = arith.constant dense<0.000000e+00> : vector<8x128xf32>
    %10 = tpu.matmul %8, %9, %cst_8 {dimension_numbers = #tpu.dot_dimension_numbers<[1], [0], [0], [1], [0, 0, 1, 1], [], []>} : vector<8x1024xbf16>, vector<1024x128xbf16>, vector<8x128xf32> -> vector<8x128xf32>
    %c0_9 = arith.constant 0 : index
    %c0_10 = arith.constant 0 : index
    %11 = vector.load %arg5[%c0_9, %c0_10] : memref<1x128xf32, #tpu.memory_space<vmem>>, vector<1x128xf32>
    %12 = vector.broadcast %11 : vector<1x128xf32> to vector<8x128xf32>
    %13 = arith.addf %10, %12 : vector<8x128xf32>
    %cst_11 = arith.constant 0.000000e+00 : f32
    %14 = vector.broadcast %cst_11 : f32 to vector<8x128xf32>
    %15 = arith.maximumf %13, %14 : vector<8x128xf32>
    %16 = arith.truncf %15 : vector<8x128xf32> to vector<8x128xbf16>
    %c0_12 = arith.constant 0 : index
    %c0_13 = arith.constant 0 : index
    %17 = vector.load %arg6[%c0_12, %c0_13] : memref<128x32xbf16, #tpu.memory_space<vmem>>, vector<128x32xbf16>
    %cst_14 = arith.constant dense<0.000000e+00> : vector<8x32xf32>
    %18 = tpu.matmul %16, %17, %cst_14 {dimension_numbers = #tpu.dot_dimension_numbers<[1], [0], [0], [1], [0, 0, 1, 1], [], []>} : vector<8x128xbf16>, vector<128x32xbf16>, vector<8x32xf32> -> vector<8x32xf32>
    %c0_15 = arith.constant 0 : index
    %c0_16 = arith.constant 0 : index
    %19 = vector.load %arg7[%c0_15, %c0_16] : memref<1x32xf32, #tpu.memory_space<vmem>>, vector<1x32xf32>
    %20 = vector.broadcast %19 : vector<1x32xf32> to vector<8x32xf32>
    %21 = arith.addf %18, %20 : vector<8x32xf32>
    %cst_17 = arith.constant 0.000000e+00 : f32
    %22 = vector.broadcast %cst_17 : f32 to vector<8x32xf32>
    %23 = arith.maximumf %21, %22 : vector<8x32xf32>
    %c0_18 = arith.constant 0 : index
    %c0_19 = arith.constant 0 : index
    %24 = vector.load %arg8[%c0_18, %c0_19] : memref<1x32xf32, #tpu.memory_space<vmem>>, vector<1x32xf32>
    %25 = vector.broadcast %24 : vector<1x32xf32> to vector<8x32xf32>
    %26 = arith.mulf %23, %25 : vector<8x32xf32>
    %cst_20 = arith.constant dense<0.000000e+00> : vector<8xf32>
    %27 = vector.multi_reduction <add>, %26, %cst_20 [1] : vector<8x32xf32> to vector<8xf32>
    %28 = vector.shape_cast %27 : vector<8xf32> to vector<8x1xf32>
    %c0_21 = arith.constant 0 : index
    %c0_22 = arith.constant 0 : index
    %29 = vector.load %arg9[%c0_21, %c0_22] : memref<1x1xf32, #tpu.memory_space<vmem>>, vector<1x1xf32>
    %30 = vector.broadcast %29 : vector<1x1xf32> to vector<8x1xf32>
    %31 = arith.addf %28, %30 : vector<8x1xf32>
    %c0_23 = arith.constant 0 : index
    %c0_24 = arith.constant 0 : index
    %32 = vector.load %arg10[%c0_23, %c0_24] : memref<8x1xf32, #tpu.memory_space<vmem>>, vector<8x1xf32>
    tpu.vector_store %arg10[%c0_23, %c0_24], %31 {strides = array<i32>} : memref<8x1xf32, #tpu.memory_space<vmem>>, vector<8x1xf32>,
    return
  }
  func.func @transform_0(%arg0: i32) -> (i32, i32) {
    %c0_i32 = arith.constant 0 : i32
    %c0_i32_0 = arith.constant 0 : i32
    return %arg0, %c0_i32 : i32, i32
  }
  func.func @transform_1(%arg0: i32) -> (i32, i32) {
    %c0_i32 = arith.constant 0 : i32
    %c0_i32_0 = arith.constant 0 : i32
    %c0_i32_1 = arith.constant 0 : i32
    return %c0_i32, %c0_i32_0 : i32, i32
  }
  func.func @transform_2(%arg0: i32) -> (i32, i32) {
    %c0_i32 = arith.constant 0 : i32
    %c0_i32_0 = arith.constant 0 : i32
    %c0_i32_1 = arith.constant 0 : i32
    return %c0_i32, %c0_i32_0 : i32, i32
  }
  func.func @transform_3(%arg0: i32) -> (i32, i32) {
    %c0_i32 = arith.constant 0 : i32
    %c0_i32_0 = arith.constant 0 : i32
    %c0_i32_1 = arith.constant 0 : i32
    return %c0_i32, %c0_i32_0 : i32, i32
  }
  func.func @transform_4(%arg0: i32) -> (i32, i32) {
    %c0_i32 = arith.constant 0 : i32
    %c0_i32_0 = arith.constant 0 : i32
    %c0_i32_1 = arith.constant 0 : i32
    return %c0_i32, %c0_i32_0 : i32, i32
  }
  func.func @transform_5(%arg0: i32) -> (i32, i32) {
    %c0_i32 = arith.constant 0 : i32
    %c0_i32_0 = arith.constant 0 : i32
    %c0_i32_1 = arith.constant 0 : i32
    return %c0_i32, %c0_i32_0 : i32, i32
  }
  func.func @transform_6(%arg0: i32) -> (i32, i32) {
    %c0_i32 = arith.constant 0 : i32
    %c0_i32_0 = arith.constant 0 : i32
    %c0_i32_1 = arith.constant 0 : i32
    return %c0_i32, %c0_i32_0 : i32, i32
  }
  func.func @transform_7(%arg0: i32) -> (i32, i32) {
    %c0_i32 = arith.constant 0 : i32
    %c0_i32_0 = arith.constant 0 : i32
    %c0_i32_1 = arith.constant 0 : i32
    return %c0_i32, %c0_i32_0 : i32, i32
  }
  func.func @transform_8(%arg0: i32) -> (i32, i32) {
    %c0_i32 = arith.constant 0 : i32
    %c0_i32_0 = arith.constant 0 : i32
    %c0_i32_1 = arith.constant 0 : i32
    return %c0_i32, %c0_i32_0 : i32, i32
  }
  func.func @transform_9(%arg0: i32) -> (i32, i32) {
    %c0_i32 = arith.constant 0 : i32
    %c0_i32_0 = arith.constant 0 : i32
    return %arg0, %c0_i32 : i32, i32
  }
}

</mosaic_0001>

<llo_original>
// kernel: tpu_custom_call.1
$region0: #{tpu_custom_call.1}
  #allocation0 [shape = 'u32[]', space=smem, size = 0x4, offset = 0x4, fixed_abs, tag = 'smem constant byte address 0x4 - core index']
  #allocation1 [shape = 'u32[72,128]{1,0:T(1,128)}', space=vmem, size = 0x9000, scoped, tag = 'internal scratch']
  #allocation2 [shape = 'f32[1,1]{1,0:T(1,128)S(1)}', space=vmem, size = 0x200, scoped, tag = 'scoped memory for tpu_custom_call.1']
  %s0 = inlined_call_operand.vmem [shape: bf16[8,36], index: 0, kind: input, shape index: {}]
  %s1 = inlined_call_operand.hbm [shape: bf16[36,1024], index: 1, kind: input, shape index: {}]
  %s2 = inlined_call_operand.vmem [shape: f32[1,1024], index: 2, kind: input, shape index: {}]
  %s3 = inlined_call_operand.hbm [shape: bf16[1024,128], index: 3, kind: input, shape index: {}]
  %s4 = inlined_call_operand.vmem [shape: f32[1,128], index: 4, kind: input, shape index: {}]
  %s5 = inlined_call_operand.vmem [shape: bf16[128,32], index: 5, kind: input, shape index: {}]
  %s6 = inlined_call_operand.vmem [shape: f32[1,32], index: 6, kind: input, shape index: {}]
  %s7 = inlined_call_operand.vmem [shape: f32[1,32], index: 7, kind: input, shape index: {}]
  %s8 = inlined_call_operand.<no memory space> [shape: f32[1,1], index: 8, kind: input, shape index: {}]
  %s9 = inlined_call_operand.vmem [shape: f32[8,1], index: 9, kind: output, shape index: {}]
  %s10 = sld [smem:[#allocation0]]
  $region54: #{tpu_custom_call.1} parent=0
    _
  %s12 = ssub.s32 1, %s10
  %s13 = scalar_select 0, %s12, %s10
  %v14 = vstv %s8
  %15 = vst [vmem:[#allocation2] sm:$0x1] %v14
  $region1: #{tpu_custom_call.1} parent=0
    #allocation3 [shape = 'u8[81920]{0}', space=vmem, size = 0x14000, scoped, tag = 'input window, operand 1, single buffered']
    #allocation4 [shape = 's32[1]{0}', space=sflag, size = 0x4, scoped, tag = 'scoped memory for tpu_custom_call.1']
    #allocation5 [shape = 'u8[262144]{0}', space=vmem, size = 0x40000, scoped, tag = 'input window, operand 3, single buffered']
    #allocation6 [shape = 's32[1]{0}', space=sflag, size = 0x4, scoped, tag = 'scoped memory for tpu_custom_call.1']
    %16 = vsyncpa [#allocation4], 0
    %17 = vsyncpa [#allocation6], 0
    // Predicated region
    $region2: #{tpu_custom_call.1} parent=1 // pred_check
      _
    $region3: #{tpu_custom_call.1} parent=1 // pred_check_branch
      %19 = sbr.rel (0) target = $region5
    $region4: #{tpu_custom_call.1} parent=1 // pred_region
      _
    $region5: #{tpu_custom_call.1} parent=1 // pred_fallthru
      _
    // Predicated region
    $region6: #{tpu_custom_call.1} parent=1 // pred_check
      _
    $region7: #{tpu_custom_call.1} parent=1 // pred_check_branch
      %21 = sbr.rel (0) target = $region9
    $region8: #{tpu_custom_call.1} parent=1 // pred_region
      %23 = vsyncadd [#allocation4], 0
      %s24 = sshll.u32 %s1, 4
      %s25 = int_to_ptr.hbm [resolvable:$true] %s24
      %s26 = sshll.u32 [#allocation3], 4
      %s27 = int_to_ptr.vmem [resolvable:$true] %s26
      %32 = dma.hbm_to_vmem [thread:$0]  %s25, 2560, %s27, [#allocation4], 512, 512, 32
    $region9: #{tpu_custom_call.1} parent=1 // pred_fallthru
      _
    // Predicated region
    $region10: #{tpu_custom_call.1} parent=1 // pred_check
      _
    $region11: #{tpu_custom_call.1} parent=1 // pred_check_branch
      %34 = sbr.rel (0) target = $region13
    $region12: #{tpu_custom_call.1} parent=1 // pred_region
      _
    $region13: #{tpu_custom_call.1} parent=1 // pred_fallthru
      _
    // Predicated region
    $region14: #{tpu_custom_call.1} parent=1 // pred_check
      _
    $region15: #{tpu_custom_call.1} parent=1 // pred_check_branch
      %36 = sbr.rel (0) target = $region17
    $region16: #{tpu_custom_call.1} parent=1 // pred_region
      %38 = vsyncadd [#allocation6], 0
      %s39 = sshll.u32 %s3, 4
      %s40 = int_to_ptr.hbm [resolvable:$true] %s39
      %s41 = sshll.u32 [#allocation5], 4
      %s42 = int_to_ptr.vmem [resolvable:$true] %s41
      %47 = dma.hbm_to_vmem [thread:$0]  %s40, 8192, %s42, [#allocation6], 64, 64, 4
    $region17: #{tpu_custom_call.1} parent=1 // pred_fallthru
      _
    // Predicated region
    $region18: #{tpu_custom_call.1} parent=1 // pred_check
      _
    $region19: #{tpu_custom_call.1} parent=1 // pred_check_branch
      %49 = sbr.rel (0) target = $region21
    $region20: #{tpu_custom_call.1} parent=1 // pred_region
      _
    $region21: #{tpu_custom_call.1} parent=1 // pred_fallthru
      _
    // Predicated region
    $region22: #{tpu_custom_call.1} parent=1 // pred_check
      _
    $region23: #{tpu_custom_call.1} parent=1 // pred_check_branch
      %51 = sbr.rel (0) target = $region25
    $region24: #{tpu_custom_call.1} parent=1 // pred_region
      _
    $region25: #{tpu_custom_call.1} parent=1 // pred_fallthru
      _
    // Predicated region
    $region26: #{tpu_custom_call.1} parent=1 // pred_check
      _
    $region27: #{tpu_custom_call.1} parent=1 // pred_check_branch
      %53 = sbr.rel (0) target = $region29
    $region28: #{tpu_custom_call.1} parent=1 // pred_region
      _
    $region29: #{tpu_custom_call.1} parent=1 // pred_fallthru
      _
    // Predicated region
    $region30: #{tpu_custom_call.1} parent=1 // pred_check
      _
    $region31: #{tpu_custom_call.1} parent=1 // pred_check_branch
      %55 = sbr.rel (0) target = $region33
    $region32: #{tpu_custom_call.1} parent=1 // pred_region
      _
    $region33: #{tpu_custom_call.1} parent=1 // pred_fallthru
      _
    // Predicated region
    $region34: #{tpu_custom_call.1} parent=1 // pred_check
      _
    $region35: #{tpu_custom_call.1} parent=1 // pred_check_branch
      %57 = sbr.rel (0) target = $region37
    $region36: #{tpu_custom_call.1} parent=1 // pred_region
      _
    $region37: #{tpu_custom_call.1} parent=1 // pred_fallthru
      _
    // Predicated region
    $region38: #{tpu_custom_call.1} parent=1 // pred_check
      _
    $region39: #{tpu_custom_call.1} parent=1 // pred_check_branch
      %59 = sbr.rel (0) target = $region41
    $region40: #{tpu_custom_call.1} parent=1 // pred_region
      %61 = dma.done [#allocation4], 2560
    $region41: #{tpu_custom_call.1} parent=1 // pred_fallthru
      _
    // Predicated region
    $region42: #{tpu_custom_call.1} parent=1 // pred_check
      _
    $region43: #{tpu_custom_call.1} parent=1 // pred_check_branch
      %63 = sbr.rel (0) target = $region45
    $region44: #{tpu_custom_call.1} parent=1 // pred_region
      %65 = dma.done [#allocation6], 8192
    $region45: #{tpu_custom_call.1} parent=1 // pred_fallthru
      _
    %v67 = vld [vmem:[%s0] sm:$0xf]
    %v68 = vld [vmem:[#allocation3] sm:$0xff]
    %v69 = vld [vmem:[#allocation3 + $0x8] sm:$0xff]
    %v70 = vld [vmem:[#allocation3 + $0x10] sm:$0xff]
    %v71 = vld [vmem:[#allocation3 + $0x18] sm:$0xff]
    %v72 = vld [vmem:[#allocation3 + $0x20] sm:$0xff]
    %v73 = vld [vmem:[#allocation3 + $0x28] sm:$0xff]
    %v74 = vld [vmem:[#allocation3 + $0x30] sm:$0xff]
    %v75 = vld [vmem:[#allocation3 + $0x38] sm:$0xff]
    %v76 = vld [vmem:[#allocation3 + $0x40] sm:$0xff]
    %v77 = vld [vmem:[#allocation3 + $0x48] sm:$0xff]
    %v78 = vld [vmem:[#allocation3 + $0x50] sm:$0xff]
    %v79 = vld [vmem:[#allocation3 + $0x58] sm:$0xff]
    %v80 = vld [vmem:[#allocation3 + $0x60] sm:$0xff]
    %v81 = vld [vmem:[#allocation3 + $0x68] sm:$0xff]
    %v82 = vld [vmem:[#allocation3 + $0x70] sm:$0xff]
    %v83 = vld [vmem:[#allocation3 + $0x78] sm:$0xff]
    %v84 = vld [vmem:[#allocation3 + $0x80] sm:$0x33]
    %v85 = vld [vmem:[#allocation3 + $0x88] sm:$0x33]
    %v86 = vld [vmem:[#allocation3 + $0x90] sm:$0x33]
    %v87 = vld [vmem:[#allocation3 + $0x98] sm:$0x33]
    %v88 = vld [vmem:[%s2] sm:$0xff]
    %v90 = vperm.slane %v88, 0
    %v91 = vperm.slane %v88, 1
    %v92 = vperm.slane %v88, 2
    %v93 = vperm.slane %v88, 3
    %v94 = vperm.slane %v88, 4
    %v95 = vperm.slane %v88, 5
    %v96 = vperm.slane %v88, 6
    %v97 = vperm.slane %v88, 7
    %v126 = vunpack.c.l.b16 %v68
    %v127 = vunpack.c.h.b16 %v68
    %v128 = vunpack.c.l.b16 %v69
    %v129 = vunpack.c.h.b16 %v69
    %v130 = vunpack.c.l.b16 %v70
    %v131 = vunpack.c.h.b16 %v70
    %v132 = vunpack.c.l.b16 %v71
    %v133 = vunpack.c.h.b16 %v71
    %v134 = vunpack.c.l.b16 %v72
    %v135 = vunpack.c.h.b16 %v72
    %v136 = vunpack.c.l.b16 %v73
    %v137 = vunpack.c.h.b16 %v73
    %v138 = vunpack.c.l.b16 %v74
    %v139 = vunpack.c.h.b16 %v74
    %v140 = vunpack.c.l.b16 %v75
    %v141 = vunpack.c.h.b16 %v75
    %v142 = vunpack.c.l.b16 %v76
    %v143 = vunpack.c.h.b16 %v76
    %v144 = vunpack.c.l.b16 %v77
    %v145 = vunpack.c.h.b16 %v77
    %v146 = vunpack.c.l.b16 %v78
    %v147 = vunpack.c.h.b16 %v78
    %v148 = vunpack.c.l.b16 %v79
    %v149 = vunpack.c.h.b16 %v79
    %v150 = vunpack.c.l.b16 %v80
    %v151 = vunpack.c.h.b16 %v80
    %v152 = vunpack.c.l.b16 %v81
    %v153 = vunpack.c.h.b16 %v81
    %v154 = vunpack.c.l.b16 %v82
    %v155 = vunpack.c.h.b16 %v82
    %v156 = vunpack.c.l.b16 %v83
    %v157 = vunpack.c.h.b16 %v83
    %v158 = vunpack.c.l.b16 %v84
    %v159 = vunpack.c.h.b16 %v84
    %v160 = vunpack.c.l.b16 %v85
    %v161 = vunpack.c.h.b16 %v85
    %v162 = vunpack.c.l.b16 %v86
    %v163 = vunpack.c.h.b16 %v86
    %v164 = vunpack.c.l.b16 %v87
    %v165 = vunpack.c.h.b16 %v87
    %v166 = vpack.c.b16 %v134, %v126
    %v167 = vpack.c.b16 %v135, %v127
    %v168 = vpack.c.b16 %v136, %v128
    %v169 = vpack.c.b16 %v137, %v129
    %v170 = vpack.c.b16 %v138, %v130
    %v171 = vpack.c.b16 %v139, %v131
    %v172 = vpack.c.b16 %v140, %v132
    %v173 = vpack.c.b16 %v141, %v133
    %v174 = vpack.c.b16 %v150, %v142
    %v175 = vpack.c.b16 %v151, %v143
    %v176 = vpack.c.b16 %v152, %v144
    %v177 = vpack.c.b16 %v153, %v145
    %v178 = vpack.c.b16 %v154, %v146
    %v179 = vpack.c.b16 %v155, %v147
    %v180 = vpack.c.b16 %v156, %v148
    %v181 = vpack.c.b16 %v157, %v149
    %v182 = vpack.c.b16 %v158, %v158
    %v183 = vpack.c.b16 %v159, %v159
    %v184 = vpack.c.b16 %v160, %v160
    %v185 = vpack.c.b16 %v161, %v161
    %v186 = vpack.c.b16 %v162, %v162
    %v187 = vpack.c.b16 %v163, %v163
    %v188 = vpack.c.b16 %v164, %v164
    %v189 = vpack.c.b16 %v165, %v165
    %vm206 = vcmask 293888
    %v208 = vsel %vm206, %v67, 0
    %vm210 = vcmask 1041408
    %v212 = vsel %vm210, %v182, 0
    %v215 = vsel %vm210, %v183, 0
    %v218 = vsel %vm210, %v184, 0
    %v221 = vsel %vm210, %v185, 0
    %v224 = vsel %vm210, %v186, 0
    %v227 = vsel %vm210, %v187, 0
    %v230 = vsel %vm210, %v188, 0
    %v233 = vsel %vm210, %v189, 0
    %235 = vmatpush.bf16.msra.mxu0 0
    %236 = vmatpush.bf16.msra.mxu0 0
    %237 = vmatpush.bf16.msra.mxu0 0
    %238 = vmatpush.bf16.msra.mxu0 0
    %239 = vmatpush.bf16.msra.mxu0 0
    %240 = vmatpush.bf16.msra.mxu0 %v212
    %241 = vmatpush.bf16.msra.mxu0 %v174
    %242 = vmatpush.bf16.msra.mxu0 %v166
    %243 = vmatmul.bf16.gmra.mxu0 %v208
    %v244 = vpop.f32.mrf.mxu0
    %v245 = vadd.f32 %v90, %v244
    %v246 = vpop.f32.mrf.mxu0
    %247 = vdwg.mxu0
    %248 = vmatpush.bf16.msra.mxu0 0
    %249 = vmatpush.bf16.msra.mxu0 0
    %250 = vmatpush.bf16.msra.mxu0 0
    %251 = vmatpush.bf16.msra.mxu0 0
    %252 = vmatpush.bf16.msra.mxu0 0
    %253 = vmatpush.bf16.msra.mxu0 %v215
    %254 = vmatpush.bf16.msra.mxu0 %v175
    %255 = vmatpush.bf16.msra.mxu0 %v167
    %256 = vmatmul.bf16.gmra.mxu0 %v208
    %v257 = vpop.f32.mrf.mxu0
    %v258 = vadd.f32 %v91, %v257
    %v259 = vpop.f32.mrf.mxu0
    %260 = vdwg.mxu0
    %261 = vmatpush.bf16.msra.mxu0 0
    %262 = vmatpush.bf16.msra.mxu0 0
    %263 = vmatpush.bf16.msra.mxu0 0
    %264 = vmatpush.bf16.msra.mxu0 0
    %265 = vmatpush.bf16.msra.mxu0 0
    %266 = vmatpush.bf16.msra.mxu0 %v218
    %267 = vmatpush.bf16.msra.mxu0 %v176
    %268 = vmatpush.bf16.msra.mxu0 %v168
    %269 = vmatmul.bf16.gmra.mxu0 %v208
    %v270 = vpop.f32.mrf.mxu0
    %v271 = vadd.f32 %v92, %v270
    %v272 = vpop.f32.mrf.mxu0
    %273 = vdwg.mxu0
    %274 = vmatpush.bf16.msra.mxu0 0
    %275 = vmatpush.bf16.msra.mxu0 0
    %276 = vmatpush.bf16.msra.mxu0 0
    %277 = vmatpush.bf16.msra.mxu0 0
    %278 = vmatpush.bf16.msra.mxu0 0
    %279 = vmatpush.bf16.msra.mxu0 %v221
    %280 = vmatpush.bf16.msra.mxu0 %v177
    %281 = vmatpush.bf16.msra.mxu0 %v169
    %282 = vmatmul.bf16.gmra.mxu0 %v208
    %v283 = vpop.f32.mrf.mxu0
    %v284 = vadd.f32 %v93, %v283
    %v285 = vpop.f32.mrf.mxu0
    %286 = vdwg.mxu0
    %287 = vmatpush.bf16.msra.mxu0 0
    %288 = vmatpush.bf16.msra.mxu0 0
    %289 = vmatpush.bf16.msra.mxu0 0
    %290 = vmatpush.bf16.msra.mxu0 0
    %291 = vmatpush.bf16.msra.mxu0 0
    %292 = vmatpush.bf16.msra.mxu0 %v224
    %293 = vmatpush.bf16.msra.mxu0 %v178
    %294 = vmatpush.bf16.msra.mxu0 %v170
    %295 = vmatmul.bf16.gmra.mxu0 %v208
    %v296 = vpop.f32.mrf.mxu0
    %v297 = vadd.f32 %v94, %v296
    %v298 = vpop.f32.mrf.mxu0
    %299 = vdwg.mxu0
    %300 = vmatpush.bf16.msra.mxu0 0
    %301 = vmatpush.bf16.msra.mxu0 0
    %302 = vmatpush.bf16.msra.mxu0 0
    %303 = vmatpush.bf16.msra.mxu0 0
    %304 = vmatpush.bf16.msra.mxu0 0
    %305 = vmatpush.bf16.msra.mxu0 %v227
    %306 = vmatpush.bf16.msra.mxu0 %v179
    %307 = vmatpush.bf16.msra.mxu0 %v171
    %308 = vmatmul.bf16.gmra.mxu0 %v208
    %v309 = vpop.f32.mrf.mxu0
    %v310 = vadd.f32 %v95, %v309
    %v311 = vpop.f32.mrf.mxu0
    %312 = vdwg.mxu0
    %313 = vmatpush.bf16.msra.mxu0 0
    %314 = vmatpush.bf16.msra.mxu0 0
    %315 = vmatpush.bf16.msra.mxu0 0
    %316 = vmatpush.bf16.msra.mxu0 0
    %317 = vmatpush.bf16.msra.mxu0 0
    %318 = vmatpush.bf16.msra.mxu0 %v230
    %319 = vmatpush.bf16.msra.mxu0 %v180
    %320 = vmatpush.bf16.msra.mxu0 %v172
    %321 = vmatmul.bf16.gmra.mxu0 %v208
    %v322 = vpop.f32.mrf.mxu0
    %v323 = vadd.f32 %v96, %v322
    %v324 = vpop.f32.mrf.mxu0
    %325 = vdwg.mxu0
    %326 = vmatpush.bf16.msra.mxu0 0
    %327 = vmatpush.bf16.msra.mxu0 0
    %328 = vmatpush.bf16.msra.mxu0 0
    %329 = vmatpush.bf16.msra.mxu0 0
    %330 = vmatpush.bf16.msra.mxu0 0
    %331 = vmatpush.bf16.msra.mxu0 %v233
    %332 = vmatpush.bf16.msra.mxu0 %v181
    %333 = vmatpush.bf16.msra.mxu0 %v173
    %334 = vmatmul.bf16.gmra.mxu0 %v208
    %v335 = vpop.f32.mrf.mxu0
    %v336 = vadd.f32 %v97, %v335
    %v337 = vpop.f32.mrf.mxu0
    %338 = vdwg.mxu0
    %v339 = vmax.f32 %v245, 0.0
    %v340 = vmax.f32 %v258, 0.0
    %v341 = vmax.f32 %v271, 0.0
    %v342 = vmax.f32 %v284, 0.0
    %v343 = vmax.f32 %v297, 0.0
    %v344 = vmax.f32 %v310, 0.0
    %v345 = vmax.f32 %v323, 0.0
    %v346 = vmax.f32 %v336, 0.0
    %v347 = vpack.c.bf16 %v339, %v339
    %v348 = vpack.c.bf16 %v340, %v340
    %v349 = vpack.c.bf16 %v341, %v341
    %v350 = vpack.c.bf16 %v342, %v342
    %v351 = vpack.c.bf16 %v343, %v343
    %v352 = vpack.c.bf16 %v344, %v344
    %v353 = vpack.c.bf16 %v345, %v345
    %v354 = vpack.c.bf16 %v346, %v346
    %v355 = vld [vmem:[#allocation5] sm:$0xf]
    %v356 = vld [vmem:[#allocation5 + $0x4] sm:$0xf]
    %v357 = vld [vmem:[#allocation5 + $0x8] sm:$0xf]
    %v358 = vld [vmem:[#allocation5 + $0xc] sm:$0xf]
    %v359 = vld [vmem:[#allocation5 + $0x10] sm:$0xf]
    %v360 = vld [vmem:[#allocation5 + $0x14] sm:$0xf]
    %v361 = vld [vmem:[#allocation5 + $0x18] sm:$0xf]
    %v362 = vld [vmem:[#allocation5 + $0x1c] sm:$0xf]
    %v363 = vld [vmem:[#allocation5 + $0x20] sm:$0xf]
    %v364 = vld [vmem:[#allocation5 + $0x24] sm:$0xf]
    %v365 = vld [vmem:[#allocation5 + $0x28] sm:$0xf]
    %v366 = vld [vmem:[#allocation5 + $0x2c] sm:$0xf]
    %v367 = vld [vmem:[#allocation5 + $0x30] sm:$0xf]
    %v368 = vld [vmem:[#allocation5 + $0x34] sm:$0xf]
    %v369 = vld [vmem:[#allocation5 + $0x38] sm:$0xf]
    %v370 = vld [vmem:[#allocation5 + $0x3c] sm:$0xf]
    %v371 = vld [vmem:[#allocation5 + $0x40] sm:$0xf]
    %v372 = vld [vmem:[#allocation5 + $0x44] sm:$0xf]
    %v373 = vld [vmem:[#allocation5 + $0x48] sm:$0xf]
    %v374 = vld [vmem:[#allocation5 + $0x4c] sm:$0xf]
    %v375 = vld [vmem:[#allocation5 + $0x50] sm:$0xf]
    %v376 = vld [vmem:[#allocation5 + $0x54] sm:$0xf]
    %v377 = vld [vmem:[#allocation5 + $0x58] sm:$0xf]
    %v378 = vld [vmem:[#allocation5 + $0x5c] sm:$0xf]
    %v379 = vld [vmem:[#allocation5 + $0x60] sm:$0xf]
    %v380 = vld [vmem:[#allocation5 + $0x64] sm:$0xf]
    %v381 = vld [vmem:[#allocation5 + $0x68] sm:$0xf]
    %v382 = vld [vmem:[#allocation5 + $0x6c] sm:$0xf]
    %v383 = vld [vmem:[#allocation5 + $0x70] sm:$0xf]
    %v384 = vld [vmem:[#allocation5 + $0x74] sm:$0xf]
    %v385 = vld [vmem:[#allocation5 + $0x78] sm:$0xf]
    %v386 = vld [vmem:[#allocation5 + $0x7c] sm:$0xf]
    %v387 = vld [vmem:[#allocation5 + $0x80] sm:$0xf]
    %v388 = vld [vmem:[#allocation5 + $0x84] sm:$0xf]
    %v389 = vld [vmem:[#allocation5 + $0x88] sm:$0xf]
    %v390 = vld [vmem:[#allocation5 + $0x8c] sm:$0xf]
    %v391 = vld [vmem:[#allocation5 + $0x90] sm:$0xf]
    %v392 = vld [vmem:[#allocation5 + $0x94] sm:$0xf]
    %v393 = vld [vmem:[#allocation5 + $0x98] sm:$0xf]
    %v394 = vld [vmem:[#allocation5 + $0x9c] sm:$0xf]
    %v395 = vld [vmem:[#allocation5 + $0xa0] sm:$0xf]
    %v396 = vld [vmem:[#allocation5 + $0xa4] sm:$0xf]
    %v397 = vld [vmem:[#allocation5 + $0xa8] sm:$0xf]
    %v398 = vld [vmem:[#allocation5 + $0xac] sm:$0xf]
    %v399 = vld [vmem:[#allocation5 + $0xb0] sm:$0xf]
    %v400 = vld [vmem:[#allocation5 + $0xb4] sm:$0xf]
    %v401 = vld [vmem:[#allocation5 + $0xb8] sm:$0xf]
    %v402 = vld [vmem:[#allocation5 + $0xbc] sm:$0xf]
    %v403 = vld [vmem:[#allocation5 + $0xc0] sm:$0xf]
    %v404 = vld [vmem:[#allocation5 + $0xc4] sm:$0xf]
    %v405 = vld [vmem:[#allocation5 + $0xc8] sm:$0xf]
    %v406 = vld [vmem:[#allocation5 + $0xcc] sm:$0xf]
    %v407 = vld [vmem:[#allocation5 + $0xd0] sm:$0xf]
    %v408 = vld [vmem:[#allocation5 + $0xd4] sm:$0xf]
    %v409 = vld [vmem:[#allocation5 + $0xd8] sm:$0xf]
    %v410 = vld [vmem:[#allocation5 + $0xdc] sm:$0xf]
    %v411 = vld [vmem:[#allocation5 + $0xe0] sm:$0xf]
    %v412 = vld [vmem:[#allocation5 + $0xe4] sm:$0xf]
    %v413 = vld [vmem:[#allocation5 + $0xe8] sm:$0xf]
    %v414 = vld [vmem:[#allocation5 + $0xec] sm:$0xf]
    %v415 = vld [vmem:[#allocation5 + $0xf0] sm:$0xf]
    %v416 = vld [vmem:[#allocation5 + $0xf4] sm:$0xf]
    %v417 = vld [vmem:[#allocation5 + $0xf8] sm:$0xf]
    %v418 = vld [vmem:[#allocation5 + $0xfc] sm:$0xf]
    %v419 = vld [vmem:[#allocation5 + $0x100] sm:$0xf]
    %v420 = vld [vmem:[#allocation5 + $0x104] sm:$0xf]
    %v421 = vld [vmem:[#allocation5 + $0x108] sm:$0xf]
    %v422 = vld [vmem:[#allocation5 + $0x10c] sm:$0xf]
    %v423 = vld [vmem:[#allocation5 + $0x110] sm:$0xf]
    %v424 = vld [vmem:[#allocation5 + $0x114] sm:$0xf]
    %v425 = vld [vmem:[#allocation5 + $0x118] sm:$0xf]
    %v426 = vld [vmem:[#allocation5 + $0x11c] sm:$0xf]
    %v427 = vld [vmem:[#allocation5 + $0x120] sm:$0xf]
    %v428 = vld [vmem:[#allocation5 + $0x124] sm:$0xf]
    %v429 = vld [vmem:[#allocation5 + $0x128] sm:$0xf]
    %v430 = vld [vmem:[#allocation5 + $0x12c] sm:$0xf]
    %v431 = vld [vmem:[#allocation5 + $0x130] sm:$0xf]
    %v432 = vld [vmem:[#allocation5 + $0x134] sm:$0xf]
    %v433 = vld [vmem:[#allocation5 + $0x138] sm:$0xf]
    %v434 = vld [vmem:[#allocation5 + $0x13c] sm:$0xf]
    %v435 = vld [vmem:[#allocation5 + $0x140] sm:$0xf]
    %v436 = vld [vmem:[#allocation5 + $0x144] sm:$0xf]
    %v437 = vld [vmem:[#allocation5 + $0x148] sm:$0xf]
    %v438 = vld [vmem:[#allocation5 + $0x14c] sm:$0xf]
    %v439 = vld [vmem:[#allocation5 + $0x150] sm:$0xf]
    %v440 = vld [vmem:[#allocation5 + $0x154] sm:$0xf]
    %v441 = vld [vmem:[#allocation5 + $0x158] sm:$0xf]
    %v442 = vld [vmem:[#allocation5 + $0x15c] sm:$0xf]
    %v443 = vld [vmem:[#allocation5 + $0x160] sm:$0xf]
    %v444 = vld [vmem:[#allocation5 + $0x164] sm:$0xf]
    %v445 = vld [vmem:[#allocation5 + $0x168] sm:$0xf]
    %v446 = vld [vmem:[#allocation5 + $0x16c] sm:$0xf]
    %v447 = vld [vmem:[#allocation5 + $0x170] sm:$0xf]
    %v448 = vld [vmem:[#allocation5 + $0x174] sm:$0xf]
    %v449 = vld [vmem:[#allocation5 + $0x178] sm:$0xf]
    %v450 = vld [vmem:[#allocation5 + $0x17c] sm:$0xf]
    %v451 = vld [vmem:[#allocation5 + $0x180] sm:$0xf]
    %v452 = vld [vmem:[#allocation5 + $0x184] sm:$0xf]
    %v453 = vld [vmem:[#allocation5 + $0x188] sm:$0xf]
    %v454 = vld [vmem:[#allocation5 + $0x18c] sm:$0xf]
    %v455 = vld [vmem:[#allocation5 + $0x190] sm:$0xf]
    %v456 = vld [vmem:[#allocation5 + $0x194] sm:$0xf]
    %v457 = vld [vmem:[#allocation5 + $0x198] sm:$0xf]
    %v458 = vld [vmem:[#allocation5 + $0x19c] sm:$0xf]
    %v459 = vld [vmem:[#allocation5 + $0x1a0] sm:$0xf]
    %v460 = vld [vmem:[#allocation5 + $0x1a4] sm:$0xf]
    %v461 = vld [vmem:[#allocation5 + $0x1a8] sm:$0xf]
    %v462 = vld [vmem:[#allocation5 + $0x1ac] sm:$0xf]
    %v463 = vld [vmem:[#allocation5 + $0x1b0] sm:$0xf]
    %v464 = vld [vmem:[#allocation5 + $0x1b4] sm:$0xf]
    %v465 = vld [vmem:[#allocation5 + $0x1b8] sm:$0xf]
    %v466 = vld [vmem:[#allocation5 + $0x1bc] sm:$0xf]
    %v467 = vld [vmem:[#allocation5 + $0x1c0] sm:$0xf]
    %v468 = vld [vmem:[#allocation5 + $0x1c4] sm:$0xf]
    %v469 = vld [vmem:[#allocation5 + $0x1c8] sm:$0xf]
    %v470 = vld [vmem:[#allocation5 + $0x1cc] sm:$0xf]
    %v471 = vld [vmem:[#allocation5 + $0x1d0] sm:$0xf]
    %v472 = vld [vmem:[#allocation5 + $0x1d4] sm:$0xf]
    %v473 = vld [vmem:[#allocation5 + $0x1d8] sm:$0xf]
    %v474 = vld [vmem:[#allocation5 + $0x1dc] sm:$0xf]
    %v475 = vld [vmem:[#allocation5 + $0x1e0] sm:$0xf]
    %v476 = vld [vmem:[#allocation5 + $0x1e4] sm:$0xf]
    %v477 = vld [vmem:[#allocation5 + $0x1e8] sm:$0xf]
    %v478 = vld [vmem:[#allocation5 + $0x1ec] sm:$0xf]
    %v479 = vld [vmem:[#allocation5 + $0x1f0] sm:$0xf]
    %v480 = vld [vmem:[#allocation5 + $0x1f4] sm:$0xf]
    %v481 = vld [vmem:[#allocation5 + $0x1f8] sm:$0xf]
    %v482 = vld [vmem:[#allocation5 + $0x1fc] sm:$0xf]
    %v483 = vld [vmem:[%s4] sm:$0x1]
    %v485 = vperm.slane %v483, 0
    %v615 = vunpack.c.l.b16 %v355
    %v616 = vunpack.c.l.b16 %v356
    %v617 = vunpack.c.l.b16 %v357
    %v618 = vunpack.c.l.b16 %v358
    %v619 = vunpack.c.l.b16 %v359
    %v620 = vunpack.c.l.b16 %v360
    %v621 = vunpack.c.l.b16 %v361
    %v622 = vunpack.c.l.b16 %v362
    %v623 = vunpack.c.l.b16 %v363
    %v624 = vunpack.c.l.b16 %v364
    %v625 = vunpack.c.l.b16 %v365
    %v626 = vunpack.c.l.b16 %v366
    %v627 = vunpack.c.l.b16 %v367
    %v628 = vunpack.c.l.b16 %v368
    %v629 = vunpack.c.l.b16 %v369
    %v630 = vunpack.c.l.b16 %v370
    %v631 = vunpack.c.l.b16 %v371
    %v632 = vunpack.c.l.b16 %v372
    %v633 = vunpack.c.l.b16 %v373
    %v634 = vunpack.c.l.b16 %v374
    %v635 = vunpack.c.l.b16 %v375
    %v636 = vunpack.c.l.b16 %v376
    %v637 = vunpack.c.l.b16 %v377
    %v638 = vunpack.c.l.b16 %v378
    %v639 = vunpack.c.l.b16 %v379
    %v640 = vunpack.c.l.b16 %v380
    %v641 = vunpack.c.l.b16 %v381
    %v642 = vunpack.c.l.b16 %v382
    %v643 = vunpack.c.l.b16 %v383
    %v644 = vunpack.c.l.b16 %v384
    %v645 = vunpack.c.l.b16 %v385
    %v646 = vunpack.c.l.b16 %v386
    %v647 = vunpack.c.l.b16 %v387
    %v648 = vunpack.c.l.b16 %v388
    %v649 = vunpack.c.l.b16 %v389
    %v650 = vunpack.c.l.b16 %v390
    %v651 = vunpack.c.l.b16 %v391
    %v652 = vunpack.c.l.b16 %v392
    %v653 = vunpack.c.l.b16 %v393
    %v654 = vunpack.c.l.b16 %v394
    %v655 = vunpack.c.l.b16 %v395
    %v656 = vunpack.c.l.b16 %v396
    %v657 = vunpack.c.l.b16 %v397
    %v658 = vunpack.c.l.b16 %v398
    %v659 = vunpack.c.l.b16 %v399
    %v660 = vunpack.c.l.b16 %v400
    %v661 = vunpack.c.l.b16 %v401
    %v662 = vunpack.c.l.b16 %v402
    %v663 = vunpack.c.l.b16 %v403
    %v664 = vunpack.c.l.b16 %v404
    %v665 = vunpack.c.l.b16 %v405
    %v666 = vunpack.c.l.b16 %v406
    %v667 = vunpack.c.l.b16 %v407
    %v668 = vunpack.c.l.b16 %v408
    %v669 = vunpack.c.l.b16 %v409
    %v670 = vunpack.c.l.b16 %v410
    %v671 = vunpack.c.l.b16 %v411
    %v672 = vunpack.c.l.b16 %v412
    %v673 = vunpack.c.l.b16 %v413
    %v674 = vunpack.c.l.b16 %v414
    %v675 = vunpack.c.l.b16 %v415
    %v676 = vunpack.c.l.b16 %v416
    %v677 = vunpack.c.l.b16 %v417
    %v678 = vunpack.c.l.b16 %v418
    %v679 = vunpack.c.l.b16 %v419
    %v680 = vunpack.c.l.b16 %v420
    %v681 = vunpack.c.l.b16 %v421
    %v682 = vunpack.c.l.b16 %v422
    %v683 = vunpack.c.l.b16 %v423
    %v684 = vunpack.c.l.b16 %v424
    %v685 = vunpack.c.l.b16 %v425
    %v686 = vunpack.c.l.b16 %v426
    %v687 = vunpack.c.l.b16 %v427
    %v688 = vunpack.c.l.b16 %v428
    %v689 = vunpack.c.l.b16 %v429
    %v690 = vunpack.c.l.b16 %v430
    %v691 = vunpack.c.l.b16 %v431
    %v692 = vunpack.c.l.b16 %v432
    %v693 = vunpack.c.l.b16 %v433
    %v694 = vunpack.c.l.b16 %v434
    %v695 = vunpack.c.l.b16 %v435
    %v696 = vunpack.c.l.b16 %v436
    %v697 = vunpack.c.l.b16 %v437
    %v698 = vunpack.c.l.b16 %v438
    %v699 = vunpack.c.l.b16 %v439
    %v700 = vunpack.c.l.b16 %v440
    %v701 = vunpack.c.l.b16 %v441
    %v702 = vunpack.c.l.b16 %v442
    %v703 = vunpack.c.l.b16 %v443
    %v704 = vunpack.c.l.b16 %v444
    %v705 = vunpack.c.l.b16 %v445
    %v706 = vunpack.c.l.b16 %v446
    %v707 = vunpack.c.l.b16 %v447
    %v708 = vunpack.c.l.b16 %v448
    %v709 = vunpack.c.l.b16 %v449
    %v710 = vunpack.c.l.b16 %v450
    %v711 = vunpack.c.l.b16 %v451
    %v712 = vunpack.c.l.b16 %v452
    %v713 = vunpack.c.l.b16 %v453
    %v714 = vunpack.c.l.b16 %v454
    %v715 = vunpack.c.l.b16 %v455
    %v716 = vunpack.c.l.b16 %v456
    %v717 = vunpack.c.l.b16 %v457
    %v718 = vunpack.c.l.b16 %v458
    %v719 = vunpack.c.l.b16 %v459
    %v720 = vunpack.c.l.b16 %v460
    %v721 = vunpack.c.l.b16 %v461
    %v722 = vunpack.c.l.b16 %v462
    %v723 = vunpack.c.l.b16 %v463
    %v724 = vunpack.c.l.b16 %v464
    %v725 = vunpack.c.l.b16 %v465
    %v726 = vunpack.c.l.b16 %v466
    %v727 = vunpack.c.l.b16 %v467
    %v728 = vunpack.c.l.b16 %v468
    %v729 = vunpack.c.l.b16 %v469
    %v730 = vunpack.c.l.b16 %v470
    %v731 = vunpack.c.l.b16 %v471
    %v732 = vunpack.c.l.b16 %v472
    %v733 = vunpack.c.l.b16 %v473
    %v734 = vunpack.c.l.b16 %v474
    %v735 = vunpack.c.l.b16 %v475
    %v736 = vunpack.c.l.b16 %v476
    %v737 = vunpack.c.l.b16 %v477
    %v738 = vunpack.c.l.b16 %v478
    %v739 = vunpack.c.l.b16 %v479
    %v740 = vunpack.c.l.b16 %v480
    %v741 = vunpack.c.l.b16 %v481
    %v742 = vunpack.c.l.b16 %v482
    %v743 = vpack.c.b16 %v616, %v615
    %v744 = vpack.c.b16 %v618, %v617
    %v745 = vpack.c.b16 %v620, %v619
    %v746 = vpack.c.b16 %v622, %v621
    %v747 = vpack.c.b16 %v624, %v623
    %v748 = vpack.c.b16 %v626, %v625
    %v749 = vpack.c.b16 %v628, %v627
    %v750 = vpack.c.b16 %v630, %v629
    %v751 = vpack.c.b16 %v632, %v631
    %v752 = vpack.c.b16 %v634, %v633
    %v753 = vpack.c.b16 %v636, %v635
    %v754 = vpack.c.b16 %v638, %v637
    %v755 = vpack.c.b16 %v640, %v639
    %v756 = vpack.c.b16 %v642, %v641
    %v757 = vpack.c.b16 %v644, %v643
    %v758 = vpack.c.b16 %v646, %v645
    %v759 = vpack.c.b16 %v648, %v647
    %v760 = vpack.c.b16 %v650, %v649
    %v761 = vpack.c.b16 %v652, %v651
    %v762 = vpack.c.b16 %v654, %v653
    %v763 = vpack.c.b16 %v656, %v655
    %v764 = vpack.c.b16 %v658, %v657
    %v765 = vpack.c.b16 %v660, %v659
    %v766 = vpack.c.b16 %v662, %v661
    %v767 = vpack.c.b16 %v664, %v663
    %v768 = vpack.c.b16 %v666, %v665
    %v769 = vpack.c.b16 %v668, %v667
    %v770 = vpack.c.b16 %v670, %v669
    %v771 = vpack.c.b16 %v672, %v671
    %v772 = vpack.c.b16 %v674, %v673
    %v773 = vpack.c.b16 %v676, %v675
    %v774 = vpack.c.b16 %v678, %v677
    %v775 = vpack.c.b16 %v680, %v679
    %v776 = vpack.c.b16 %v682, %v681
    %v777 = vpack.c.b16 %v684, %v683
    %v778 = vpack.c.b16 %v686, %v685
    %v779 = vpack.c.b16 %v688, %v687
    %v780 = vpack.c.b16 %v690, %v689
    %v781 = vpack.c.b16 %v692, %v691
    %v782 = vpack.c.b16 %v694, %v693
    %v783 = vpack.c.b16 %v696, %v695
    %v784 = vpack.c.b16 %v698, %v697
    %v785 = vpack.c.b16 %v700, %v699
    %v786 = vpack.c.b16 %v702, %v701
    %v787 = vpack.c.b16 %v704, %v703
    %v788 = vpack.c.b16 %v706, %v705
    %v789 = vpack.c.b16 %v708, %v707
    %v790 = vpack.c.b16 %v710, %v709
    %v791 = vpack.c.b16 %v712, %v711
    %v792 = vpack.c.b16 %v714, %v713
    %v793 = vpack.c.b16 %v716, %v715
    %v794 = vpack.c.b16 %v718, %v717
    %v795 = vpack.c.b16 %v720, %v719
    %v796 = vpack.c.b16 %v722, %v721
    %v797 = vpack.c.b16 %v724, %v723
    %v798 = vpack.c.b16 %v726, %v725
    %v799 = vpack.c.b16 %v728, %v727
    %v800 = vpack.c.b16 %v730, %v729
    %v801 = vpack.c.b16 %v732, %v731
    %v802 = vpack.c.b16 %v734, %v733
    %v803 = vpack.c.b16 %v736, %v735
    %v804 = vpack.c.b16 %v738, %v737
    %v805 = vpack.c.b16 %v740, %v739
    %v806 = vpack.c.b16 %v742, %v741
    %871 = vmatpush.bf16.msra.mxu0 %v750
    %872 = vmatpush.bf16.msra.mxu0 %v749
    %873 = vmatpush.bf16.msra.mxu0 %v748
    %874 = vmatpush.bf16.msra.mxu0 %v747
    %875 = vmatpush.bf16.msra.mxu0 %v746
    %876 = vmatpush.bf16.msra.mxu0 %v745
    %877 = vmatpush.bf16.msra.mxu0 %v744
    %878 = vmatpush.bf16.msra.mxu0 %v743
    %879 = vmatmul.bf16.gmra.mxu0 %v347
    %v880 = vpop.f32.mrf.mxu0
    %v881 = vadd.f32 %v485, %v880
    %v882 = vpop.f32.mrf.mxu0
    %883 = vdwg.mxu0
    %884 = vmatpush.bf16.msra.mxu0 %v758
    %885 = vmatpush.bf16.msra.mxu0 %v757
    %886 = vmatpush.bf16.msra.mxu0 %v756
    %887 = vmatpush.bf16.msra.mxu0 %v755
    %888 = vmatpush.bf16.msra.mxu0 %v754
    %889 = vmatpush.bf16.msra.mxu0 %v753
    %890 = vmatpush.bf16.msra.mxu0 %v752
    %891 = vmatpush.bf16.msra.mxu0 %v751
    %892 = vmatmul.bf16.gmra.mxu0 %v348
    %v893 = vpop.f32.mrf.mxu0
    %v894 = vadd.f32 %v881, %v893
    %v895 = vpop.f32.mrf.mxu0
    %896 = vdwg.mxu0
    %897 = vmatpush.bf16.msra.mxu0 %v766
    %898 = vmatpush.bf16.msra.mxu0 %v765
    %899 = vmatpush.bf16.msra.mxu0 %v764
    %900 = vmatpush.bf16.msra.mxu0 %v763
    %901 = vmatpush.bf16.msra.mxu0 %v762
    %902 = vmatpush.bf16.msra.mxu0 %v761
    %903 = vmatpush.bf16.msra.mxu0 %v760
    %904 = vmatpush.bf16.msra.mxu0 %v759
    %905 = vmatmul.bf16.gmra.mxu0 %v349
    %v906 = vpop.f32.mrf.mxu0
    %v907 = vadd.f32 %v894, %v906
    %v908 = vpop.f32.mrf.mxu0
    %909 = vdwg.mxu0
    %910 = vmatpush.bf16.msra.mxu0 %v774
    %911 = vmatpush.bf16.msra.mxu0 %v773
    %912 = vmatpush.bf16.msra.mxu0 %v772
    %913 = vmatpush.bf16.msra.mxu0 %v771
    %914 = vmatpush.bf16.msra.mxu0 %v770
    %915 = vmatpush.bf16.msra.mxu0 %v769
    %916 = vmatpush.bf16.msra.mxu0 %v768
    %917 = vmatpush.bf16.msra.mxu0 %v767
    %918 = vmatmul.bf16.gmra.mxu0 %v350
    %v919 = vpop.f32.mrf.mxu0
    %v920 = vadd.f32 %v907, %v919
    %v921 = vpop.f32.mrf.mxu0
    %922 = vdwg.mxu0
    %923 = vmatpush.bf16.msra.mxu0 %v782
    %924 = vmatpush.bf16.msra.mxu0 %v781
    %925 = vmatpush.bf16.msra.mxu0 %v780
    %926 = vmatpush.bf16.msra.mxu0 %v779
    %927 = vmatpush.bf16.msra.mxu0 %v778
    %928 = vmatpush.bf16.msra.mxu0 %v777
    %929 = vmatpush.bf16.msra.mxu0 %v776
    %930 = vmatpush.bf16.msra.mxu0 %v775
    %931 = vmatmul.bf16.gmra.mxu0 %v351
    %v932 = vpop.f32.mrf.mxu0
    %v933 = vadd.f32 %v920, %v932
    %v934 = vpop.f32.mrf.mxu0
    %935 = vdwg.mxu0
    %936 = vmatpush.bf16.msra.mxu0 %v790
    %937 = vmatpush.bf16.msra.mxu0 %v789
    %938 = vmatpush.bf16.msra.mxu0 %v788
    %939 = vmatpush.bf16.msra.mxu0 %v787
    %940 = vmatpush.bf16.msra.mxu0 %v786
    %941 = vmatpush.bf16.msra.mxu0 %v785
    %942 = vmatpush.bf16.msra.mxu0 %v784
    %943 = vmatpush.bf16.msra.mxu0 %v783
    %944 = vmatmul.bf16.gmra.mxu0 %v352
    %v945 = vpop.f32.mrf.mxu0
    %v946 = vadd.f32 %v933, %v945
    %v947 = vpop.f32.mrf.mxu0
    %948 = vdwg.mxu0
    %949 = vmatpush.bf16.msra.mxu0 %v798
    %950 = vmatpush.bf16.msra.mxu0 %v797
    %951 = vmatpush.bf16.msra.mxu0 %v796
    %952 = vmatpush.bf16.msra.mxu0 %v795
    %953 = vmatpush.bf16.msra.mxu0 %v794
    %954 = vmatpush.bf16.msra.mxu0 %v793
    %955 = vmatpush.bf16.msra.mxu0 %v792
    %956 = vmatpush.bf16.msra.mxu0 %v791
    %957 = vmatmul.bf16.gmra.mxu0 %v353
    %v958 = vpop.f32.mrf.mxu0
    %v959 = vadd.f32 %v946, %v958
    %v960 = vpop.f32.mrf.mxu0
    %961 = vdwg.mxu0
    %962 = vmatpush.bf16.msra.mxu0 %v806
    %963 = vmatpush.bf16.msra.mxu0 %v805
    %964 = vmatpush.bf16.msra.mxu0 %v804
    %965 = vmatpush.bf16.msra.mxu0 %v803
    %966 = vmatpush.bf16.msra.mxu0 %v802
    %967 = vmatpush.bf16.msra.mxu0 %v801
    %968 = vmatpush.bf16.msra.mxu0 %v800
    %969 = vmatpush.bf16.msra.mxu0 %v799
    %970 = vmatmul.bf16.gmra.mxu0 %v354
    %v971 = vpop.f32.mrf.mxu0
    %v972 = vadd.f32 %v959, %v971
    %v973 = vpop.f32.mrf.mxu0
    %974 = vdwg.mxu0
    %v975 = vmax.f32 %v972, 0.0
    %v976 = vpack.c.bf16 %v975, %v975
    %v977 = vld [vmem:[%s5] sm:$0xf]
    %v978 = vld [vmem:[%s5 + $0x4] sm:$0xf]
    %v979 = vld [vmem:[%s5 + $0x8] sm:$0xf]
    %v980 = vld [vmem:[%s5 + $0xc] sm:$0xf]
    %v981 = vld [vmem:[%s5 + $0x10] sm:$0xf]
    %v982 = vld [vmem:[%s5 + $0x14] sm:$0xf]
    %v983 = vld [vmem:[%s5 + $0x18] sm:$0xf]
    %v984 = vld [vmem:[%s5 + $0x1c] sm:$0xf]
    %v985 = vld [vmem:[%s5 + $0x20] sm:$0xf]
    %v986 = vld [vmem:[%s5 + $0x24] sm:$0xf]
    %v987 = vld [vmem:[%s5 + $0x28] sm:$0xf]
    %v988 = vld [vmem:[%s5 + $0x2c] sm:$0xf]
    %v989 = vld [vmem:[%s5 + $0x30] sm:$0xf]
    %v990 = vld [vmem:[%s5 + $0x34] sm:$0xf]
    %v991 = vld [vmem:[%s5 + $0x38] sm:$0xf]
    %v992 = vld [vmem:[%s5 + $0x3c] sm:$0xf]
    %v993 = vld [vmem:[%s6] sm:$0x1]
    %v995 = vperm.slane %v993, 0
    %v1013 = vunpack.c.l.b16 %v977
    %v1014 = vunpack.c.l.b16 %v978
    %v1015 = vunpack.c.l.b16 %v979
    %v1016 = vunpack.c.l.b16 %v980
    %v1017 = vunpack.c.l.b16 %v981
    %v1018 = vunpack.c.l.b16 %v982
    %v1019 = vunpack.c.l.b16 %v983
    %v1020 = vunpack.c.l.b16 %v984
    %v1021 = vunpack.c.l.b16 %v985
    %v1022 = vunpack.c.l.b16 %v986
    %v1023 = vunpack.c.l.b16 %v987
    %v1024 = vunpack.c.l.b16 %v988
    %v1025 = vunpack.c.l.b16 %v989
    %v1026 = vunpack.c.l.b16 %v990
    %v1027 = vunpack.c.l.b16 %v991
    %v1028 = vunpack.c.l.b16 %v992
    %v1029 = vpack.c.b16 %v1014, %v1013
    %v1030 = vpack.c.b16 %v1016, %v1015
    %v1031 = vpack.c.b16 %v1018, %v1017
    %v1032 = vpack.c.b16 %v1020, %v1019
    %v1033 = vpack.c.b16 %v1022, %v1021
    %v1034 = vpack.c.b16 %v1024, %v1023
    %v1035 = vpack.c.b16 %v1026, %v1025
    %v1036 = vpack.c.b16 %v1028, %v1027
    %1045 = vmatpush.bf16.msra.mxu0 %v1036
    %1046 = vmatpush.bf16.msra.mxu0 %v1035
    %1047 = vmatpush.bf16.msra.mxu0 %v1034
    %1048 = vmatpush.bf16.msra.mxu0 %v1033
    %1049 = vmatpush.bf16.msra.mxu0 %v1032
    %1050 = vmatpush.bf16.msra.mxu0 %v1031
    %1051 = vmatpush.bf16.msra.mxu0 %v1030
    %1052 = vmatpush.bf16.msra.mxu0 %v1029
    %1053 = vmatmul.bf16.gmra.mxu0 %v976
    %v1054 = vpop.f32.mrf.mxu0
    %v1055 = vadd.f32 %v995, %v1054
    %v1056 = vpop.f32.mrf.mxu0
    %1057 = vdwg.mxu0
    %v1058 = vmax.f32 %v1055, 0.0
    %v1059 = vld [vmem:[%s7] sm:$0x1]
    %v1061 = vperm.slane %v1059, 0
    %v1063 = vmul.f32 %v1058, %v1061
    %vm1064 = vcmask 261120
    %v1065 = vsel %vm1064, %v1063, 0.0
    %1066 = vadd.xlane.f32.xlu0 %v1065
    %v1067 = vpop.xlane.xlu0 %1066
    %v1068 = vld [vmem:[#allocation2] sm:$0x1]
    %v1070 = vperm.slane %v1068, 0
    %v1072 = vadd.f32 %v1067, %v1070
    %vm1073 = vcmask 7168
    %1074 = vst.msk [vmem:[%s9] sm:$0xff] %vm1073, %v1072
    // Predicated region
    $region46: #{tpu_custom_call.1} parent=1 // pred_check
      _
    $region47: #{tpu_custom_call.1} parent=1 // pred_check_branch
      %1076 = sbr.rel (0) target = $region49
    $region48: #{tpu_custom_call.1} parent=1 // pred_region
      _
    $region49: #{tpu_custom_call.1} parent=1 // pred_fallthru
      _
    // Predicated region
    $region50: #{tpu_custom_call.1} parent=1 // pred_check
      _
    $region51: #{tpu_custom_call.1} parent=1 // pred_check_branch
      %1078 = sbr.rel (0) target = $region53
    $region52: #{tpu_custom_call.1} parent=1 // pred_region
      _
    $region53: #{tpu_custom_call.1} parent=1 // pred_fallthru
      _
    %1079 = vsyncpa [#allocation4], 1
    %1080 = vsyncpa [#allocation6], 1

</llo_original>
